<compile_context>
chip_gen: v7x
topology: tpu7x:2x2x1
jax: 0.10.0
libtpu: 0.0.40
codegen_flags: <defaults>
</compile_context>

<pallas_src>
import functools

import jax
import jax.numpy as jnp
from jax.experimental import pallas as pl
from jax.experimental.pallas import tpu as pltpu


def _int_pow(x, n):
    """x**n for non-negative integer n via repeated multiplies (VPU only, no EUP)."""
    if n == 0:
        return jnp.ones_like(x)
    result = None
    base = x
    while n > 0:
        if n & 1:
            result = base if result is None else result * base
        n >>= 1
        if n:
            base = base * base
    return result


def _focal_kernel(pred_ref, tgt_ref, out_ref, acc_ref, *, gamma, neg_inv_denom):
    n = pl.program_id(0)
    j = pl.program_id(1)

    @pl.when(jnp.logical_and(n == 0, j == 0))
    def _init():
        acc_ref[...] = jnp.zeros_like(acc_ref)

    x = pred_ref[...].astype(jnp.float32)    # (1, C, TP), widen in-kernel
    t = tgt_ref[...].astype(jnp.float32)     # (1, C, TP)

    # log_softmax along the class (sublane) axis, numerically stable.
    m = jnp.max(x, axis=1, keepdims=True)
    shifted = x - m
    lse = jnp.log(jnp.sum(jnp.exp(shifted), axis=1, keepdims=True))
    logits = shifted - lse                   # log p  (<= 0)
    p = jnp.exp(logits)                      # softmax probs

    one_minus_p = 1.0 - p
    g = float(gamma)
    if g.is_integer() and g >= 0:
        w = _int_pow(one_minus_p, int(g))    # e.g. gamma=2 -> (1-p)*(1-p)
    else:
        # clamp guards against p rounding marginally above 1 -> NaN in pow
        w = jnp.power(jnp.maximum(one_minus_p, 0.0), g)

    entropy = w * logits * t
    acc_ref[...] = acc_ref[...] + jnp.sum(entropy)

    @pl.when(jnp.logical_and(n == pl.num_programs(0) - 1,
                             j == pl.num_programs(1) - 1))
    def _finalize():
        out_ref[...] = acc_ref[...] * neg_inv_denom


def _choose_pixel_tile(P, max_tile=1024):
    """Largest multiple-of-128 divisor of P that is <= max_tile (or P itself)."""
    if P % 128 != 0:
        # Full pixel axis as one block (always a legal block shape).
        # TODO(synk): very large P that is not a multiple of 128 would need padding.
        return P
    tp = max(128, (min(max_tile, P) // 128) * 128)
    while P % tp != 0:
        tp -= 128
    return tp


def focal_loss(pred, target, gamma):
    """pred, target: (N, C, H, W); target is a dense (e.g. one-hot) float mask.

    Returns the scalar focal loss, matching FocalSegmenterV0.forward.
    """
    N, C, H, W = pred.shape
    assert target.shape == pred.shape
    P = H * W
    pred3 = pred.reshape(N, C, P)    # free view (contiguous), pixels on lanes
    tgt3 = target.reshape(N, C, P)

    TP = _choose_pixel_tile(P)
    num_pb = P // TP
    neg_inv_denom = -1.0 / float(N * C * P)

    kernel = functools.partial(
        _focal_kernel, gamma=float(gamma), neg_inv_denom=neg_inv_denom
    )

    out = pl.pallas_call(
        kernel,
        out_shape=jax.ShapeDtypeStruct((1, 1), jnp.float32),
        grid=(N, num_pb),
        in_specs=[
            pl.BlockSpec((1, C, TP), lambda n, j: (n, 0, j)),
            pl.BlockSpec((1, C, TP), lambda n, j: (n, 0, j)),
        ],
        out_specs=pl.BlockSpec((1, 1), lambda n, j: (0, 0)),
        scratch_shapes=[pltpu.VMEM((1, 1), jnp.float32)],
        compiler_params=pltpu.CompilerParams(
            dimension_semantics=("arbitrary", "arbitrary"),
            vmem_limit_bytes=32 * 1024 * 1024,
        ),
    )(pred3, tgt3)
    return out[0, 0]


def focal_loss_ref(pred, target, gamma):
    """Pure-JAX reference mirroring the PyTorch module."""
    logits = jax.nn.log_softmax(pred, axis=1)
    entropy = jnp.power(1.0 - jnp.exp(logits), gamma) * logits * target
    return -jnp.mean(entropy)


if __name__ == "__main__":
    key = jax.random.PRNGKey(0)
    k1, k2 = jax.random.split(key)

    N, C, H, W = 2, 4, 16, 16
    gamma = 2.0

    pred = jax.random.normal(k1, (N, C, H, W), dtype=jnp.float32)
    labels = jax.random.randint(k2, (N, H, W), 0, C, dtype=jnp.int32)
    target = jax.nn.one_hot(labels, C, axis=1, dtype=jnp.float32)  # (N, C, H, W)

    loss = focal_loss(pred, target, gamma)
    jax.block_until_ready(loss)

    ref = focal_loss_ref(pred, target, gamma)
    assert jnp.allclose(loss, ref, atol=1e-5, rtol=1e-5), (loss, ref)

    print("KERNEL_OK")
</pallas_src>

<mosaic_0001>
module attributes {stable_mosaic.version = 11 : i64} {
  func.func @_focal_kernel(%arg0: i32, %arg1: i32, %arg2: memref<1x4x256xf32, #tpu.memory_space<vmem>>, %arg3: memref<1x4x256xf32, #tpu.memory_space<vmem>>, %arg4: memref<1x1xf32, #tpu.memory_space<vmem>>, %arg5: memref<1x1xf32, #tpu.memory_space<vmem>>) attributes {dimension_semantics = [#tpu.dimension_semantics<arbitrary>, #tpu.dimension_semantics<arbitrary>], iteration_bounds = array<i64: 2, 1>, scalar_prefetch = 0 : i64, scratch_operands = 1 : i64, tpu.core_type = #tpu.core_type<tc>, window_params = [{transform_indices = @transform_0, window_bounds = array<i64: 1, 4, 256>}, {transform_indices = @transform_1, window_bounds = array<i64: 1, 4, 256>}, {pipeline_mode = #tpu.pipeline_mode<synchronous>, transform_indices = @transform_2, window_bounds = array<i64: 1, 1>}]} {
    %c0_i32 = arith.constant 0 : i32
    %0 = arith.cmpi eq, %arg0, %c0_i32 : i32
    %c0_i32_0 = arith.constant 0 : i32
    %1 = arith.cmpi eq, %arg1, %c0_i32_0 : i32
    %2 = arith.andi %0, %1 : i1
    %3 = arith.extui %2 : i1 to i32
    %c0_i32_1 = arith.constant 0 : i32
    %4 = arith.cmpi ne, %3, %c0_i32_1 : i32
    scf.if %4 {
      %cst_16 = arith.constant 0.000000e+00 : f32
      %36 = vector.broadcast %cst_16 : f32 to vector<1x1xf32>
      %c0_17 = arith.constant 0 : index
      %c0_18 = arith.constant 0 : index
      %37 = vector.load %arg5[%c0_17, %c0_18] : memref<1x1xf32, #tpu.memory_space<vmem>>, vector<1x1xf32>
      tpu.vector_store %arg5[%c0_17, %c0_18], %36 {strides = array<i32>} : memref<1x1xf32, #tpu.memory_space<vmem>>, vector<1x1xf32>,
    } else {
    }
    %c0 = arith.constant 0 : index
    %c0_2 = arith.constant 0 : index
    %c0_3 = arith.constant 0 : index
    %5 = vector.load %arg2[%c0, %c0_2, %c0_3] : memref<1x4x256xf32, #tpu.memory_space<vmem>>, vector<1x4x256xf32>
    %c0_4 = arith.constant 0 : index
    %c0_5 = arith.constant 0 : index
    %c0_6 = arith.constant 0 : index
    %6 = vector.load %arg3[%c0_4, %c0_5, %c0_6] : memref<1x4x256xf32, #tpu.memory_space<vmem>>, vector<1x4x256xf32>
    %cst = arith.constant dense<0xFF800000> : vector<1x256xf32>
    %7 = vector.multi_reduction <maximumf>, %5, %cst [1] : vector<1x4x256xf32> to vector<1x256xf32>
    %8 = vector.shape_cast %7 : vector<1x256xf32> to vector<1x1x256xf32>
    %9 = vector.broadcast %8 : vector<1x1x256xf32> to vector<1x4x256xf32>
    %10 = arith.subf %5, %9 : vector<1x4x256xf32>
    %11 = math.exp %10 : vector<1x4x256xf32>
    %cst_7 = arith.constant dense<0.000000e+00> : vector<1x256xf32>
    %12 = vector.multi_reduction <add>, %11, %cst_7 [1] : vector<1x4x256xf32> to vector<1x256xf32>
    %13 = vector.shape_cast %12 : vector<1x256xf32> to vector<1x1x256xf32>
    %14 = math.log %13 : vector<1x1x256xf32>
    %15 = vector.broadcast %14 : vector<1x1x256xf32> to vector<1x4x256xf32>
    %16 = arith.subf %10, %15 : vector<1x4x256xf32>
    %17 = math.exp %16 : vector<1x4x256xf32>
    %cst_8 = arith.constant 1.000000e+00 : f32
    %18 = vector.broadcast %cst_8 : f32 to vector<1x4x256xf32>
    %19 = arith.subf %18, %17 : vector<1x4x256xf32>
    %20 = arith.mulf %19, %19 : vector<1x4x256xf32>
    %21 = arith.mulf %20, %16 : vector<1x4x256xf32>
    %22 = arith.mulf %21, %6 : vector<1x4x256xf32>
    %c0_9 = arith.constant 0 : index
    %c0_10 = arith.constant 0 : index
    %23 = vector.load %arg5[%c0_9, %c0_10] : memref<1x1xf32, #tpu.memory_space<vmem>>, vector<1x1xf32>
    %24 = vector.shape_cast %22 : vector<1x4x256xf32> to vector<1x1x4x256xf32>
    %cst_11 = arith.constant dense<0.000000e+00> : vector<1xf32>
    %25 = vector.multi_reduction <add>, %24, %cst_11 [1, 2, 3] : vector<1x1x4x256xf32> to vector<1xf32>
    %26 = vector.shape_cast %25 : vector<1xf32> to vector<1x1x1x1xf32>
    %27 = vector.extract %26[0, 0, 0, 0] : f32 from vector<1x1x1x1xf32>
    %28 = vector.broadcast %27 : f32 to vector<1x1xf32>
    %29 = arith.addf %23, %28 : vector<1x1xf32>
    %c0_12 = arith.constant 0 : index
    %c0_13 = arith.constant 0 : index
    %30 = vector.load %arg5[%c0_12, %c0_13] : memref<1x1xf32, #tpu.memory_space<vmem>>, vector<1x1xf32>
    tpu.vector_store %arg5[%c0_12, %c0_13], %29 {strides = array<i32>} : memref<1x1xf32, #tpu.memory_space<vmem>>, vector<1x1xf32>,
    %c1_i32 = arith.constant 1 : i32
    %31 = arith.cmpi eq, %arg0, %c1_i32 : i32
    %c0_i32_14 = arith.constant 0 : i32
    %32 = arith.cmpi eq, %arg1, %c0_i32_14 : i32
    %33 = arith.andi %31, %32 : i1
    %34 = arith.extui %33 : i1 to i32
    %c0_i32_15 = arith.constant 0 : i32
    %35 = arith.cmpi ne, %34, %c0_i32_15 : i32
    scf.if %35 {
      %c0_16 = arith.constant 0 : index
      %c0_17 = arith.constant 0 : index
      %36 = vector.load %arg5[%c0_16, %c0_17] : memref<1x1xf32, #tpu.memory_space<vmem>>, vector<1x1xf32>
      %cst_18 = arith.constant -4.8828125E-4 : f32
      %37 = vector.broadcast %cst_18 : f32 to vector<1x1xf32>
      %38 = arith.mulf %36, %37 : vector<1x1xf32>
      %c0_19 = arith.constant 0 : index
      %c0_20 = arith.constant 0 : index
      %39 = vector.load %arg4[%c0_19, %c0_20] : memref<1x1xf32, #tpu.memory_space<vmem>>, vector<1x1xf32>
      tpu.vector_store %arg4[%c0_19, %c0_20], %38 {strides = array<i32>} : memref<1x1xf32, #tpu.memory_space<vmem>>, vector<1x1xf32>,
    } else {
    }
    return
  }
  func.func @transform_0(%arg0: i32, %arg1: i32) -> (i32, i32, i32) {
    %c0_i32 = arith.constant 0 : i32
    %c0_i32_0 = arith.constant 0 : i32
    return %arg0, %c0_i32, %arg1 : i32, i32, i32
  }
  func.func @transform_1(%arg0: i32, %arg1: i32) -> (i32, i32, i32) {
    %c0_i32 = arith.constant 0 : i32
    %c0_i32_0 = arith.constant 0 : i32
    return %arg0, %c0_i32, %arg1 : i32, i32, i32
  }
  func.func @transform_2(%arg0: i32, %arg1: i32) -> (i32, i32) {
    %c0_i32 = arith.constant 0 : i32
    %c0_i32_0 = arith.constant 0 : i32
    %c0_i32_1 = arith.constant 0 : i32
    return %c0_i32, %c0_i32_0 : i32, i32
  }
}

</mosaic_0001>

<llo_original>
// kernel: tpu_custom_call.1
$region0: #{tpu_custom_call.1}
  #allocation0 [shape = 'u32[]', space=smem, size = 0x4, offset = 0x4, fixed_abs, tag = 'smem constant byte address 0x4 - core index']
  #allocation1 [shape = 'u32[144,128]{1,0:T(1,128)}', space=vmem, size = 0x12000, scoped, tag = 'internal scratch']
  #allocation2 [shape = 'f32[1,1]{1,0:T(1,128)}', space=vmem, size = 0x200, scoped, tag = 'scratch operand']
  %s0 = inlined_call_operand.hbm [shape: f32[2,4,256], index: 0, kind: input, shape index: {}]
  %s1 = inlined_call_operand.hbm [shape: f32[2,4,256], index: 1, kind: input, shape index: {}]
  %s2 = inlined_call_operand.hbm [shape: f32[1,1], index: 2, kind: output, shape index: {}]
  %s3 = sld [smem:[#allocation0]]
  $region57: #{tpu_custom_call.1} parent=0
    _
  %s5 = ssub.s32 1, %s3
  %s6 = scalar_select 0, %s5, %s3
  $region1: #{tpu_custom_call.1} parent=0
    #allocation3 [shape = 'u8[8192]{0}', space=vmem, size = 0x2000, scoped, tag = 'input window, operand 0']
    #allocation4 [shape = 's32[2]{0}', space=sflag, size = 0x8, scoped, tag = 'scoped memory for tpu_custom_call.1']
    #allocation5 [shape = 's32[2]{0}', space=sflag, size = 0x8, scoped, tag = 'scoped memory for tpu_custom_call.1']
    #allocation6 [shape = 'u8[8192]{0}', space=vmem, size = 0x2000, scoped, tag = 'input window, operand 1']
    #allocation7 [shape = 's32[2]{0}', space=sflag, size = 0x8, scoped, tag = 'scoped memory for tpu_custom_call.1']
    #allocation8 [shape = 'u8[512]{0}', space=vmem, size = 0x400, scoped, tag = 'output window, operand 0, single buffered']
    %7 = vsyncpa [#allocation4], 0
    %s8 = scalar_lea.sflag [#allocation4], 1
    %9 = vsyncpa %s8, 0
    %10 = vsyncpa [#allocation7], 0
    %s11 = scalar_lea.sflag [#allocation7], 1
    %12 = vsyncpa %s11, 0
    %13 = vsyncpa [#allocation5], 0
    loop: start=0, step=1, limit=4
    $region2: #{tpu_custom_call.1} parent=1 // loop_pre_header
      _
    $region3: #{tpu_custom_call.1} parent=1 // loop_header
      %s15 = sphi 0, %s19
      %p16 = scmp.ge.s32.totalorder %s15, 4
      %s22 = sphi 0, %s34
      %s23 = sphi 0, %s30
      %s24 = sphi 0, %s22
      %s25 = sphi 0, %s23
      %s26 = sphi 0, %s24
      %s27 = sphi 0, %s25
      %s39 = sphi 0, %s41
      %s42 = sphi 0, %s39
      %s43 = sphi 0, %s42
      %s59 = sphi 0, %s43
      %s67 = sphi 0, %s69
      %s70 = sphi 0, %s67
      %s71 = sphi 0, %s70
      %s87 = sphi 0, %s71
      %s91 = sphi 0, %s91
      %s93 = sphi 0, %s91
      %s94 = sphi 0, %s93
      %s108 = sphi 0, %s94
    $region4: #{tpu_custom_call.1} parent=1 // loop_header_branch
      %18 = sbr.rel (%p16) target = $region8
    $region5: #{tpu_custom_call.1} parent=1 // loop_body
      %s20 = ssub.s32 %s15, 1
      %s21 = ssub.s32 %s15, 2
      %s28 = sadd.s32 1, %s23
      %p29 = scmp.ge.s32.totalorder %s28, 1
      %s30 = scalar_select %p29, 0, %s28
      %s31 = sadd.s32 1, %s22
      %s32 = scalar_select %p29, %s31, %s22
      %p33 = scmp.ge.s32.totalorder %s32, 2
      %s34 = scalar_select %p33, 0, %s32
      %s35 = ssub.s32 %s22, %s34
      %s36 = ssub.s32 %s23, %s30
      %s37 = sor.u32 %s35, %s36
      %p38 = scmp.eq.s32.totalorder %s37, 0
      %s40 = sadd.s32 %s39, 1
      %s41 = scalar_select %p38, %s39, %s40
      %p44 = pneg %p38
      %p45 = scmp.eq.s32.totalorder %s15, 1
      %p46 = por %p44, %p45
      %p47 = scmp.ne.s32.totalorder %s39, %s42
      %p48 = scmp.eq.s32.totalorder %s15, 0
      %p49 = por %p47, %p48
      %p50 = scmp.ne.s32.totalorder %s39, %s42
      %p51 = scmp.eq.s32.totalorder %s20, 1
      %p52 = por %p50, %p51
      %p53 = scmp.ne.s32.totalorder %s42, %s43
      %p54 = scmp.eq.s32.totalorder %s20, 0
      %p55 = por %p53, %p54
      %p56 = scmp.ne.s32.totalorder %s42, %s43
      %p57 = scmp.eq.s32.totalorder %s21, 1
      %p58 = por %p56, %p57
      %p60 = scmp.ne.s32.totalorder %s43, %s59
      %p61 = scmp.eq.s32.totalorder %s21, 0
      %p62 = por %p60, %p61
      %s63 = ssub.s32 %s22, %s34
      %s64 = ssub.s32 %s23, %s30
      %s65 = sor.u32 %s63, %s64
      %p66 = scmp.eq.s32.totalorder %s65, 0
      %s68 = sadd.s32 %s67, 1
      %s69 = scalar_select %p66, %s67, %s68
      %p72 = pneg %p66
      %p73 = scmp.eq.s32.totalorder %s15, 1
      %p74 = por %p72, %p73
      %p75 = scmp.ne.s32.totalorder %s67, %s70
      %p76 = scmp.eq.s32.totalorder %s15, 0
      %p77 = por %p75, %p76
      %p78 = scmp.ne.s32.totalorder %s67, %s70
      %p79 = scmp.eq.s32.totalorder %s20, 1
      %p80 = por %p78, %p79
      %p81 = scmp.ne.s32.totalorder %s70, %s71
      %p82 = scmp.eq.s32.totalorder %s20, 0
      %p83 = por %p81, %p82
      %p84 = scmp.ne.s32.totalorder %s70, %s71
      %p85 = scmp.eq.s32.totalorder %s21, 1
      %p86 = por %p84, %p85
      %p88 = scmp.ne.s32.totalorder %s71, %s87
      %p89 = scmp.eq.s32.totalorder %s21, 0
      %p90 = por %p88, %p89
      %s92 = sadd.s32 %s91, 1
      %p95 = scmp.eq.s32.totalorder %s15, 1
      %p96 = scmp.ne.s32.totalorder %s91, %s93
      %p97 = scmp.eq.s32.totalorder %s15, 0
      %p98 = por %p96, %p97
      %p99 = scmp.ne.s32.totalorder %s91, %s93
      %p100 = scmp.eq.s32.totalorder %s20, 1
      %p101 = por %p99, %p100
      %p102 = scmp.ne.s32.totalorder %s93, %s94
      %p103 = scmp.eq.s32.totalorder %s20, 0
      %p104 = por %p102, %p103
      %p105 = scmp.ne.s32.totalorder %s93, %s94
      %p106 = scmp.eq.s32.totalorder %s21, 1
      %p107 = por %p105, %p106
      %p109 = scmp.ne.s32.totalorder %s94, %s108
      %p110 = scmp.eq.s32.totalorder %s21, 0
      %p111 = por %p109, %p110
      %p112 = scmp.le.s32.totalorder 1, %s15
      %p113 = scmp.lt.s32.totalorder %s15, 3
      %p114 = pnand %p112, %p113
      %p115 = pneg %p114
      // Predicated region
      $region9: #{tpu_custom_call.1} parent=5 // pred_check
        _
      $region10: #{tpu_custom_call.1} parent=5 // pred_check_branch
        %117 = sbr.rel (%p114) target = $region12
      $region11: #{tpu_custom_call.1} parent=5 // pred_region
        %s118 = ssub.s32 %s15, 1
      $region12: #{tpu_custom_call.1} parent=5 // pred_fallthru
        _
      %p119 = scmp.lt.s32.totalorder %s15, 2
      // Predicated region
      $region13: #{tpu_custom_call.1} parent=5 // pred_check
        %p120 = pneg %p119
      $region14: #{tpu_custom_call.1} parent=5 // pred_check_branch
        %122 = sbr.rel (%p120) target = $region16
      $region15: #{tpu_custom_call.1} parent=5 // pred_region
        // Predicated region
        $region17: #{tpu_custom_call.1} parent=15 // pred_check
          %p123 = pneg %p49
        $region18: #{tpu_custom_call.1} parent=15 // pred_check_branch
          %125 = sbr.rel (%p123) target = $region20
        $region19: #{tpu_custom_call.1} parent=15 // pred_region
          %s126 = sand.u32 %s39, 1
          %s127 = scalar_lea.sflag [#allocation4], %s126
          %s128 = sand.u32 %s39, 1
          %s129 = smul.addr %s128, 8
          %s130 = scalar_lea.vmem [#allocation3], %s129
          %s131 = smul.u32 2, %s23
          %s133 = ssub.s32 128, 128
          %134 = vsyncadd %s127, %s133
          %s135 = smul.addr %s22, 2
          %s136 = sadd.s32 %s131, %s135
          %s137 = smul.addr %s136, 64
          %s138 = scalar_lea.hbm %s0, %s137
          %s140 = sshll.u32 %s130, 4
          %s141 = int_to_ptr.vmem [resolvable:$true] %s140
          %143 = dma.hbm_to_vmem [thread:$0]  %s138, 128, %s141, %s127
        $region20: #{tpu_custom_call.1} parent=15 // pred_fallthru
          _
        // Predicated region
        $region21: #{tpu_custom_call.1} parent=15 // pred_check
          %p144 = pneg %p77
        $region22: #{tpu_custom_call.1} parent=15 // pred_check_branch
          %146 = sbr.rel (%p144) target = $region24
        $region23: #{tpu_custom_call.1} parent=15 // pred_region
          %s147 = sand.u32 %s67, 1
          %s148 = scalar_lea.sflag [#allocation7], %s147
          %s149 = sand.u32 %s67, 1
          %s150 = smul.addr %s149, 8
          %s151 = scalar_lea.vmem [#allocation6], %s150
          %s152 = smul.u32 2, %s23
          %s154 = ssub.s32 128, 128
          %155 = vsyncadd %s148, %s154
          %s156 = smul.addr %s22, 2
          %s157 = sadd.s32 %s152, %s156
          %s158 = smul.addr %s157, 64
          %s159 = scalar_lea.hbm %s1, %s158
          %s161 = sshll.u32 %s151, 4
          %s162 = int_to_ptr.vmem [resolvable:$true] %s161
          %164 = dma.hbm_to_vmem [thread:$0]  %s159, 128, %s162, %s148
        $region24: #{tpu_custom_call.1} parent=15 // pred_fallthru
          _
      $region16: #{tpu_custom_call.1} parent=5 // pred_fallthru
        _
      %p165 = scmp.le.s32.totalorder 1, %s15
      %p166 = scmp.lt.s32.totalorder %s15, 3
      %p167 = pnand %p165, %p166
      %p168 = pneg %p167
      // Predicated region
      $region25: #{tpu_custom_call.1} parent=5 // pred_check
        _
      $region26: #{tpu_custom_call.1} parent=5 // pred_check_branch
        %170 = sbr.rel (%p167) target = $region28
      $region27: #{tpu_custom_call.1} parent=5 // pred_region
        %s171 = ssub.s32 %s15, 1
        %s172 = sand.u32 %s42, 1
        %s173 = scalar_lea.sflag [#allocation4], %s172
        %s174 = sand.u32 %s42, 1
        %s175 = smul.addr %s174, 8
        %s176 = scalar_lea.vmem [#allocation3], %s175
        // Predicated region
        $region29: #{tpu_custom_call.1} parent=27 // pred_check
          %p177 = pneg %p55
        $region30: #{tpu_custom_call.1} parent=27 // pred_check_branch
          %179 = sbr.rel (%p177) target = $region32
        $region31: #{tpu_custom_call.1} parent=27 // pred_region
          %180 = dma.done %s173, 128
        $region32: #{tpu_custom_call.1} parent=27 // pred_fallthru
          _
        %s181 = sand.u32 %s70, 1
        %s182 = scalar_lea.sflag [#allocation7], %s181
        %s183 = sand.u32 %s70, 1
        %s184 = smul.addr %s183, 8
        %s185 = scalar_lea.vmem [#allocation6], %s184
        // Predicated region
        $region33: #{tpu_custom_call.1} parent=27 // pred_check
          %p186 = pneg %p83
        $region34: #{tpu_custom_call.1} parent=27 // pred_check_branch
          %188 = sbr.rel (%p186) target = $region36
        $region35: #{tpu_custom_call.1} parent=27 // pred_region
          %189 = dma.done %s182, 128
        $region36: #{tpu_custom_call.1} parent=27 // pred_fallthru
          _
        %s190 = sand.u32 %s42, 1
        %s191 = scalar_lea.sflag [#allocation4], %s190
        %s192 = sand.u32 %s42, 1
        %s193 = smul.addr %s192, 8
        %s194 = scalar_lea.vmem [#allocation3], %s193
        %p195 = pneg %p55
        %p196 = pneg %p52
        %s197 = sand.u32 %s70, 1
        %s198 = scalar_lea.sflag [#allocation7], %s197
        %s199 = sand.u32 %s70, 1
        %s200 = smul.addr %s199, 8
        %s201 = scalar_lea.vmem [#allocation6], %s200
        %p202 = pneg %p83
        %p203 = pneg %p80
        %p204 = pneg %p104
        %p205 = pneg %p101
        %s206 = smul.u32 2, %s25
        %s207 = smul.u32 2, %s25
        %p208 = scmp.eq.s32.totalorder %s24, 0
        %p209 = scmp.eq.s32.totalorder %s25, 0
        %p210 = pnand %p208, %p209
        %p211 = pneg %p210
        // Predicated region
        $region37: #{tpu_custom_call.1} parent=27 // pred_check
          _
        $region38: #{tpu_custom_call.1} parent=27 // pred_check_branch
          %213 = sbr.rel (%p210) target = $region40
        $region39: #{tpu_custom_call.1} parent=27 // pred_region
          %vm214 = vcmask 0
          %215 = vst.msk [vmem:[#allocation2] sm:$0x1] %vm214, 0.0
        $region40: #{tpu_custom_call.1} parent=27 // pred_fallthru
          _
        %v216 = vld [vmem:[%s176] sm:$0xff]
        %v217 = vld [vmem:[%s185] sm:$0xff]
        %v219 = vcombine.high %v216, %v216
        %vm221 = vcmask 1043456
        %v222 = vsel %vm221, %v216, -inf
        %v223 = vrot.slane %v222, 4
        %v224 = vmax.f32 %v222, %v223
        %v225 = vrot.slane %v224, 2
        %v226 = vmax.f32 %v224, %v225
        %v227 = vrot.slane %v226, 1
        %v228 = vmax.f32 %v226, %v227
        %v229 = vsel %vm221, %v219, -inf
        %v230 = vrot.slane %v229, 4
        %v231 = vmax.f32 %v229, %v230
        %v232 = vrot.slane %v231, 2
        %v233 = vmax.f32 %v231, %v232
        %v234 = vrot.slane %v233, 1
        %v235 = vmax.f32 %v233, %v234
        %v238 = vcombine.low %v228, %v235
        %v240 = vsub.f32 %v216, %v238
        %v241 = vmul.f32 %v240, 1.442695
        %v242 = vpow.pop %v241
        %v244 = vcombine.high %v242, %v242
        %v246 = vsel %vm221, %v242, 0.0
        %v247 = vrot.slane %v246, 4
        %v248 = vadd.f32 %v246, %v247
        %v249 = vrot.slane %v248, 2
        %v250 = vadd.f32 %v248, %v249
        %v251 = vrot.slane %v250, 1
        %v252 = vadd.f32 %v250, %v251
        %v253 = vsel %vm221, %v244, 0.0
        %v254 = vrot.slane %v253, 4
        %v255 = vadd.f32 %v253, %v254
        %v256 = vrot.slane %v255, 2
        %v257 = vadd.f32 %v255, %v256
        %v258 = vrot.slane %v257, 1
        %v259 = vadd.f32 %v257, %v258
        %v260 = vlog2.pop %v252
        %v261 = vmul.f32 %v260, 0.6931472
        %v262 = vlog2.pop %v259
        %v263 = vmul.f32 %v262, 0.6931472
        %v266 = vcombine.low %v261, %v263
        %v268 = vsub.f32 %v240, %v266
        %v269 = vmul.f32 %v268, 1.442695
        %v270 = vpow.pop %v269
        %v271 = vsub.f32 1.0, %v270
        %v272 = vmul.f32 %v271, %v271
        %v273 = vmul.f32 %v272, %v268
        %v274 = vmul.f32 %v273, %v217
        %v275 = vld [vmem:[#allocation2] sm:$0x1]
        %v277 = vcombine.high %v274, %v274
        %v279 = vsel %vm221, %v274, 0.0
        %v280 = vsel %vm221, %v277, 0.0
        %v281 = vadd.f32 %v279, %v280
        %282 = vadd.xlane.f32.xlu0 %v281
        %v283 = vpop.xlane.xlu0 %282
        %v284 = vrot.slane %v283, 4
        %v285 = vadd.f32 %v283, %v284
        %v286 = vrot.slane %v285, 2
        %v287 = vadd.f32 %v285, %v286
        %v288 = vrot.slane %v287, 1
        %v289 = vadd.f32 %v287, %v288
        %s290 = vtos %v289
        %v291 = vstv %s290
        %v292 = vadd.f32 %v275, %v291
        %vm293 = vcmask 0
        %294 = vst.msk [vmem:[#allocation2] sm:$0x1] %vm293, %v292
        %p295 = scmp.eq.s32.totalorder %s24, 1
        %p296 = pnand %p295, %p209
        %p297 = pneg %p296
        // Predicated region
        $region41: #{tpu_custom_call.1} parent=27 // pred_check
          _
        $region42: #{tpu_custom_call.1} parent=27 // pred_check_branch
          %299 = sbr.rel (%p296) target = $region44
        $region43: #{tpu_custom_call.1} parent=27 // pred_region
          %v300 = vld [vmem:[#allocation2] sm:$0x1]
          %v301 = vmul.f32 %v300, -0.00048828125
          %302 = vst.msk [vmem:[#allocation8] sm:$0x1] %vm293, %v301
        $region44: #{tpu_custom_call.1} parent=27 // pred_fallthru
          _
        // Predicated region
        $region45: #{tpu_custom_call.1} parent=27 // pred_check
          %p303 = pneg %p101
        $region46: #{tpu_custom_call.1} parent=27 // pred_check_branch
          %305 = sbr.rel (%p303) target = $region48
        $region47: #{tpu_custom_call.1} parent=27 // pred_region
          %s307 = ssub.s32 16, 16
          %308 = vsyncadd [#allocation5], %s307
          %s310 = sshll.u32 [#allocation8], 4
          %s311 = int_to_ptr.vmem [resolvable:$true] %s310
          %313 = dma.vmem_to_hbm [thread:$0]  %s311, 16, %s2, [#allocation5]
        $region48: #{tpu_custom_call.1} parent=27 // pred_fallthru
          _
        // Predicated region
        $region49: #{tpu_custom_call.1} parent=27 // pred_check
          %p314 = pneg %p101
        $region50: #{tpu_custom_call.1} parent=27 // pred_check_branch
          %316 = sbr.rel (%p314) target = $region52
        $region51: #{tpu_custom_call.1} parent=27 // pred_region
          %317 = dma.done [#allocation5], 16
        $region52: #{tpu_custom_call.1} parent=27 // pred_fallthru
          _
      $region28: #{tpu_custom_call.1} parent=5 // pred_fallthru
        _
      %p318 = scmp.le.s32.totalorder 2, %s15
      // Predicated region
      $region53: #{tpu_custom_call.1} parent=5 // pred_check
        %p319 = pneg %p318
      $region54: #{tpu_custom_call.1} parent=5 // pred_check_branch
        %321 = sbr.rel (%p319) target = $region56
      $region55: #{tpu_custom_call.1} parent=5 // pred_region
        %s322 = ssub.s32 %s15, 2
      $region56: #{tpu_custom_call.1} parent=5 // pred_fallthru
        _
    $region6: #{tpu_custom_call.1} parent=1 // loop_footer
      %s19 = sadd.s32 1, %s15
    $region7: #{tpu_custom_call.1} parent=1 // loop_footer_branch
      %14 = sbr.rel target = $region3
    $region8: #{tpu_custom_call.1} parent=1 // loop_exit
      _
    %323 = vsyncpa [#allocation4], 1
    %s324 = scalar_lea.sflag [#allocation4], 1
    %325 = vsyncpa %s324, 1
    %326 = vsyncpa [#allocation7], 1
    %s327 = scalar_lea.sflag [#allocation7], 1
    %328 = vsyncpa %s327, 1
    %329 = vsyncpa [#allocation5], 1
    %s330 = scalar_lea.sflag [#allocation5], 1
    %331 = vsyncpa %s330, 1

</llo_original>
